<compile_context>
chip_gen: v7x
topology: tpu7x:2x2x1
jax: 0.10.0
libtpu: 0.0.40
codegen_flags: <defaults>
</compile_context>

<pallas_src>
import jax
import jax.numpy as jnp
from jax.experimental import pallas as pl
from jax.experimental.pallas import tpu as pltpu


def attention_kernel(x_ref, w_ref, b_ref, v_ref, o_ref):
    # x_ref: (Bt, S, D)  batch tile of embeddings (input dtype, e.g. f32)
    # w_ref: (D, D)      W weight, pre-transposed to (in, out), MXU dtype (bf16)
    # b_ref: (1, D)      W bias (f32)
    # v_ref: (1, D)      v weight (f32)
    # o_ref: (Bt, 1, D)  attended embeddings for this batch tile
    Bt, S, D = x_ref.shape
    x = x_ref[...]
    w = w_ref[...]
    b = b_ref[...]
    v = v_ref[...]

    # Fold batch into the matmul M dimension: one (Bt*S, D) @ (D, D) MXU pass
    # instead of Bt small matmuls.  S stays a multiple of 8 (or the full
    # extent) so this reshape is a sublane re-label, not a VMEM relayout.
    x2 = x.reshape(Bt * S, D)
    # bf16 operands into the MXU, f32 accumulate; epilogue stays f32.
    t = jnp.tanh(
        jnp.dot(x2.astype(w.dtype), w, preferred_element_type=jnp.float32)
        + b.astype(jnp.float32)
    )                                                      # (Bt*S, D) f32
    t3 = t.reshape(Bt, S, D)

    # scores = t @ v.T as a VPU multiply + lane reduction (an N=1 MXU matmul
    # would waste a whole MXU pass).
    scores = jnp.sum(t3 * v.astype(jnp.float32), axis=-1, keepdims=True)  # (Bt,S,1)

    # Per-batch softmax over S, normalized once at the end.
    m = jnp.max(scores, axis=1, keepdims=True)             # (Bt, 1, 1)
    e = jnp.exp(scores - m)                                # (Bt, S, 1)
    l = jnp.sum(e, axis=1, keepdims=True)                  # (Bt, 1, 1)
    acc = jnp.sum(e * x.astype(jnp.float32), axis=1, keepdims=True)  # (Bt, 1, D)
    inv_l = pl.reciprocal(l, approx=True)                  # EUP slot, ~free
    o_ref[...] = (acc * inv_l).astype(o_ref.dtype)


def _pick_batch_tile(B, S, D, x_itemsize, *, target_steps=8,
                     vmem_budget_bytes=16 << 20):
    """Largest divisor of B that (a) leaves >= target_steps grid steps when B
    allows (and >= 2 steps for v7x megacore / DMA-compute overlap) and
    (b) keeps the per-step working set (double-buffered x tile + ~3 f32
    full-tile temporaries) inside a VMEM budget valid on v5e/v6e/v7x."""
    bytes_per_row = S * D * (2 * x_itemsize + 3 * 4)
    cap = max(1, vmem_budget_bytes // max(1, bytes_per_row))
    want = max(1, B // target_steps)
    bt = int(max(1, min(cap, want, B)))
    while B % bt:
        bt -= 1
    return bt


def attention_layer(embeddings, w, b, v, *, batch_tile=None,
                    mxu_dtype=jnp.bfloat16, single_buffer_weights=True):
    """Fused attention pooling.

    embeddings: (B, S, D)
    w: (D, D)  nn.Linear(D, D).weight  (out, in)
    b: (D,)    nn.Linear(D, D).bias
    v: (1, D)  nn.Linear(D, 1, bias=False).weight
    returns: (B, D)
    """
    B, S, D = embeddings.shape
    if batch_tile is None:
        batch_tile = _pick_batch_tile(B, S, D, embeddings.dtype.itemsize)
    assert B % batch_tile == 0, "batch_tile must divide B"

    # Pre-transpose once (no in-kernel XLU transpose) and cast W to the MXU
    # dtype once in the wrapper (halves W's HBM DMA vs per-step in-kernel cast).
    wt = jnp.transpose(w).astype(mxu_dtype)       # (in, out)
    b2d = b.reshape(1, D).astype(jnp.float32)
    v2d = v.reshape(1, D).astype(jnp.float32)

    grid = (B // batch_tile,)

    def const_spec(shape, single_buffer):
        # Grid-invariant blocks (W / b / v): with Buffered(1) they are not
        # double-buffered, freeing VMEM for a larger batch tile.
        if single_buffer and hasattr(pl, "Buffered"):
            return pl.BlockSpec(shape, lambda i: (0,) * len(shape),
                                pipeline_mode=pl.Buffered(1))
        return pl.BlockSpec(shape, lambda i: (0,) * len(shape))

    def run(single_buffer):
        call = pl.pallas_call(
            attention_kernel,
            # (B, 1, D): last two block dims equal the full array dims, so any
            # batch_tile satisfies the (8, 128) block rule; squeezed below.
            out_shape=jax.ShapeDtypeStruct((B, 1, D), embeddings.dtype),
            grid=grid,
            in_specs=[
                pl.BlockSpec((batch_tile, S, D), lambda i: (i, 0, 0)),  # x tile
                const_spec((D, D), single_buffer),                      # W.T
                const_spec((1, D), single_buffer),                      # bias
                const_spec((1, D), single_buffer),                      # v
            ],
            out_specs=pl.BlockSpec((batch_tile, 1, D), lambda i: (i, 0, 0)),
            compiler_params=pltpu.CompilerParams(
                dimension_semantics=("parallel",),
                vmem_limit_bytes=32 << 20,
            ),
        )
        return call(embeddings, wt, b2d, v2d)

    if single_buffer_weights:
        try:
            out3 = run(True)
        except Exception:
            # Lowering rejected single-buffered constant blocks; fall back to
            # default double buffering (only costs VMEM, not correctness).
            out3 = run(False)
    else:
        out3 = run(False)

    return out3.reshape(B, D)
    # TODO(synk): for very large S, add an inner S loop / "arbitrary" grid axis
    # with an online-softmax (m, l, acc) accumulator instead of materializing
    # the whole (Bt, S, D) tile; for production D < 128, present the output as
    # a lane-dense (B/k, k*D) slab to avoid masked vst on the store.


def attention_layer_ref(embeddings, w, b, v):
    # pure-JAX reference with identical semantics to the PyTorch module (f32)
    transformed = jnp.tanh(jnp.einsum("bsd,od->bso", embeddings, w) + b)
    scores = jnp.einsum("bsd,od->bso", transformed, v)       # (B, S, 1)
    attn = jax.nn.softmax(scores, axis=1)
    return jnp.sum(attn * embeddings, axis=1)


if __name__ == "__main__":
    key = jax.random.PRNGKey(0)
    B, S, D = 2, 8, 32  # batch, sequence, input_size

    k_x, k_w, k_b, k_v = jax.random.split(key, 4)
    embeddings = jax.random.normal(k_x, (B, S, D), dtype=jnp.float32)
    # deterministic "Linear" parameters (shapes match nn.Linear(D, D) / nn.Linear(D, 1))
    w_weight = jax.random.normal(k_w, (D, D), dtype=jnp.float32) * 0.1
    w_bias = jax.random.normal(k_b, (D,), dtype=jnp.float32) * 0.1
    v_weight = jax.random.normal(k_v, (1, D), dtype=jnp.float32) * 0.1

    out = attention_layer(embeddings, w_weight, w_bias, v_weight)
    out = jax.block_until_ready(out)

    ref = attention_layer_ref(embeddings, w_weight, w_bias, v_weight)
    assert out.shape == (B, D)
    # bf16 MXU operands + approx reciprocal => looser tolerance than pure f32.
    assert jnp.allclose(out, ref, atol=5e-2, rtol=5e-2), "mismatch vs reference"

    print("KERNEL_OK")
</pallas_src>

<mosaic_0001>
module attributes {stable_mosaic.version = 11 : i64} {
  func.func @attention_kernel(%arg0: i32, %arg1: memref<1x8x32xf32, #tpu.memory_space<vmem>>, %arg2: memref<32x32xbf16, #tpu.memory_space<vmem>>, %arg3: memref<1x32xf32, #tpu.memory_space<vmem>>, %arg4: memref<1x32xf32, #tpu.memory_space<vmem>>, %arg5: memref<1x1x32xf32, #tpu.memory_space<vmem>>) attributes {dimension_semantics = [#tpu.dimension_semantics<parallel>], iteration_bounds = array<i64: 2>, scalar_prefetch = 0 : i64, scratch_operands = 0 : i64, tpu.core_type = #tpu.core_type<tc>, window_params = [{transform_indices = @transform_0, window_bounds = array<i64: 1, 8, 32>}, {pipeline_mode = #tpu.pipeline_mode<synchronous>, transform_indices = @transform_1, window_bounds = array<i64: 32, 32>}, {pipeline_mode = #tpu.pipeline_mode<synchronous>, transform_indices = @transform_2, window_bounds = array<i64: 1, 32>}, {pipeline_mode = #tpu.pipeline_mode<synchronous>, transform_indices = @transform_3, window_bounds = array<i64: 1, 32>}, {transform_indices = @transform_4, window_bounds = array<i64: 1, 1, 32>}]} {
    %c0 = arith.constant 0 : index
    %c0_0 = arith.constant 0 : index
    %c0_1 = arith.constant 0 : index
    %0 = vector.load %arg1[%c0, %c0_0, %c0_1] : memref<1x8x32xf32, #tpu.memory_space<vmem>>, vector<1x8x32xf32>
    %c0_2 = arith.constant 0 : index
    %c0_3 = arith.constant 0 : index
    %1 = vector.load %arg2[%c0_2, %c0_3] : memref<32x32xbf16, #tpu.memory_space<vmem>>, vector<32x32xbf16>
    %c0_4 = arith.constant 0 : index
    %c0_5 = arith.constant 0 : index
    %2 = vector.load %arg3[%c0_4, %c0_5] : memref<1x32xf32, #tpu.memory_space<vmem>>, vector<1x32xf32>
    %c0_6 = arith.constant 0 : index
    %c0_7 = arith.constant 0 : index
    %3 = vector.load %arg4[%c0_6, %c0_7] : memref<1x32xf32, #tpu.memory_space<vmem>>, vector<1x32xf32>
    %4 = vector.shape_cast %0 : vector<1x8x32xf32> to vector<8x32xf32>
    %5 = arith.truncf %4 : vector<8x32xf32> to vector<8x32xbf16>
    %cst = arith.constant dense<0.000000e+00> : vector<8x32xf32>
    %6 = tpu.matmul %5, %1, %cst {dimension_numbers = #tpu.dot_dimension_numbers<[1], [0], [0], [1], [0, 0, 1, 1], [], []>} : vector<8x32xbf16>, vector<32x32xbf16>, vector<8x32xf32> -> vector<8x32xf32>
    %7 = vector.broadcast %2 : vector<1x32xf32> to vector<8x32xf32>
    %8 = arith.addf %6, %7 : vector<8x32xf32>
    %9 = math.tanh %8 : vector<8x32xf32>
    %10 = vector.shape_cast %9 : vector<8x32xf32> to vector<1x8x32xf32>
    %11 = vector.shape_cast %3 : vector<1x32xf32> to vector<1x1x32xf32>
    %12 = vector.broadcast %11 : vector<1x1x32xf32> to vector<1x8x32xf32>
    %13 = arith.mulf %10, %12 : vector<1x8x32xf32>
    %cst_8 = arith.constant dense<0.000000e+00> : vector<1x8xf32>
    %14 = vector.multi_reduction <add>, %13, %cst_8 [2] : vector<1x8x32xf32> to vector<1x8xf32>
    %15 = vector.shape_cast %14 : vector<1x8xf32> to vector<1x8x1xf32>
    %cst_9 = arith.constant dense<0xFF800000> : vector<1x1xf32>
    %16 = vector.multi_reduction <maximumf>, %15, %cst_9 [1] : vector<1x8x1xf32> to vector<1x1xf32>
    %17 = vector.shape_cast %16 : vector<1x1xf32> to vector<1x1x1xf32>
    %18 = vector.broadcast %17 : vector<1x1x1xf32> to vector<1x8x1xf32>
    %19 = arith.subf %15, %18 : vector<1x8x1xf32>
    %20 = math.exp %19 : vector<1x8x1xf32>
    %cst_10 = arith.constant dense<0.000000e+00> : vector<1x1xf32>
    %21 = vector.multi_reduction <add>, %20, %cst_10 [1] : vector<1x8x1xf32> to vector<1x1xf32>
    %22 = vector.shape_cast %21 : vector<1x1xf32> to vector<1x1x1xf32>
    %23 = vector.broadcast %20 : vector<1x8x1xf32> to vector<1x8x32xf32>
    %24 = arith.mulf %23, %0 : vector<1x8x32xf32>
    %cst_11 = arith.constant dense<0.000000e+00> : vector<1x32xf32>
    %25 = vector.multi_reduction <add>, %24, %cst_11 [1] : vector<1x8x32xf32> to vector<1x32xf32>
    %26 = vector.shape_cast %25 : vector<1x32xf32> to vector<1x1x32xf32>
    %27 = tpu.reciprocal %22 {approx = true} : vector<1x1x1xf32> -> vector<1x1x1xf32>
    %28 = vector.broadcast %27 : vector<1x1x1xf32> to vector<1x1x32xf32>
    %29 = arith.mulf %26, %28 : vector<1x1x32xf32>
    %c0_12 = arith.constant 0 : index
    %c0_13 = arith.constant 0 : index
    %c0_14 = arith.constant 0 : index
    %30 = vector.load %arg5[%c0_12, %c0_13, %c0_14] : memref<1x1x32xf32, #tpu.memory_space<vmem>>, vector<1x1x32xf32>
    tpu.vector_store %arg5[%c0_12, %c0_13, %c0_14], %29 {strides = array<i32>} : memref<1x1x32xf32, #tpu.memory_space<vmem>>, vector<1x1x32xf32>,
    return
  }
  func.func @transform_0(%arg0: i32) -> (i32, i32, i32) {
    %c0_i32 = arith.constant 0 : i32
    %c0_i32_0 = arith.constant 0 : i32
    %c0_i32_1 = arith.constant 0 : i32
    return %arg0, %c0_i32, %c0_i32_0 : i32, i32, i32
  }
  func.func @transform_1(%arg0: i32) -> (i32, i32) {
    %c0_i32 = arith.constant 0 : i32
    %c0_i32_0 = arith.constant 0 : i32
    %c0_i32_1 = arith.constant 0 : i32
    return %c0_i32, %c0_i32_0 : i32, i32
  }
  func.func @transform_2(%arg0: i32) -> (i32, i32) {
    %c0_i32 = arith.constant 0 : i32
    %c0_i32_0 = arith.constant 0 : i32
    %c0_i32_1 = arith.constant 0 : i32
    return %c0_i32, %c0_i32_0 : i32, i32
  }
  func.func @transform_3(%arg0: i32) -> (i32, i32) {
    %c0_i32 = arith.constant 0 : i32
    %c0_i32_0 = arith.constant 0 : i32
    %c0_i32_1 = arith.constant 0 : i32
    return %c0_i32, %c0_i32_0 : i32, i32
  }
  func.func @transform_4(%arg0: i32) -> (i32, i32, i32) {
    %c0_i32 = arith.constant 0 : i32
    %c0_i32_0 = arith.constant 0 : i32
    %c0_i32_1 = arith.constant 0 : i32
    return %arg0, %c0_i32, %c0_i32_0 : i32, i32, i32
  }
}

module attributes {stable_mosaic.version = 11 : i64} {
  func.func @attention_kernel(%arg0: i32, %arg1: memref<1x8x32xf32, #tpu.memory_space<vmem>>, %arg2: memref<32x32xbf16, #tpu.memory_space<vmem>>, %arg3: memref<1x32xf32, #tpu.memory_space<vmem>>, %arg4: memref<1x32xf32, #tpu.memory_space<vmem>>, %arg5: memref<1x1x32xf32, #tpu.memory_space<vmem>>) attributes {dimension_semantics = [#tpu.dimension_semantics<parallel>], iteration_bounds = array<i64: 2>, scalar_prefetch = 0 : i64, scratch_operands = 0 : i64, tpu.core_type = #tpu.core_type<tc>, window_params = [{transform_indices = @transform_0, window_bounds = array<i64: 1, 8, 32>}, {pipeline_mode = #tpu.pipeline_mode<synchronous>, transform_indices = @transform_1, window_bounds = array<i64: 32, 32>}, {pipeline_mode = #tpu.pipeline_mode<synchronous>, transform_indices = @transform_2, window_bounds = array<i64: 1, 32>}, {pipeline_mode = #tpu.pipeline_mode<synchronous>, transform_indices = @transform_3, window_bounds = array<i64: 1, 32>}, {transform_indices = @transform_4, window_bounds = array<i64: 1, 1, 32>}]} {
    %c0 = arith.constant 0 : index
    %c0_0 = arith.constant 0 : index
    %c0_1 = arith.constant 0 : index
    %0 = vector.load %arg1[%c0, %c0_0, %c0_1] : memref<1x8x32xf32, #tpu.memory_space<vmem>>, vector<1x8x32xf32>
    %c0_2 = arith.constant 0 : index
    %c0_3 = arith.constant 0 : index
    %1 = vector.load %arg2[%c0_2, %c0_3] : memref<32x32xbf16, #tpu.memory_space<vmem>>, vector<32x32xbf16>
    %c0_4 = arith.constant 0 : index
    %c0_5 = arith.constant 0 : index
    %2 = vector.load %arg3[%c0_4, %c0_5] : memref<1x32xf32, #tpu.memory_space<vmem>>, vector<1x32xf32>
    %c0_6 = arith.constant 0 : index
    %c0_7 = arith.constant 0 : index
    %3 = vector.load %arg4[%c0_6, %c0_7] : memref<1x32xf32, #tpu.memory_space<vmem>>, vector<1x32xf32>
    %4 = vector.shape_cast %0 : vector<1x8x32xf32> to vector<8x32xf32>
    %5 = arith.truncf %4 : vector<8x32xf32> to vector<8x32xbf16>
    %cst = arith.constant dense<0.000000e+00> : vector<8x32xf32>
    %6 = tpu.matmul %5, %1, %cst {dimension_numbers = #tpu.dot_dimension_numbers<[1], [0], [0], [1], [0, 0, 1, 1], [], []>} : vector<8x32xbf16>, vector<32x32xbf16>, vector<8x32xf32> -> vector<8x32xf32>
    %7 = vector.broadcast %2 : vector<1x32xf32> to vector<8x32xf32>
    %8 = arith.addf %6, %7 : vector<8x32xf32>
    %9 = math.tanh %8 : vector<8x32xf32>
    %10 = vector.shape_cast %9 : vector<8x32xf32> to vector<1x8x32xf32>
    %11 = vector.shape_cast %3 : vector<1x32xf32> to vector<1x1x32xf32>
    %12 = vector.broadcast %11 : vector<1x1x32xf32> to vector<1x8x32xf32>
    %13 = arith.mulf %10, %12 : vector<1x8x32xf32>
    %cst_8 = arith.constant dense<0.000000e+00> : vector<1x8xf32>
    %14 = vector.multi_reduction <add>, %13, %cst_8 [2] : vector<1x8x32xf32> to vector<1x8xf32>
    %15 = vector.shape_cast %14 : vector<1x8xf32> to vector<1x8x1xf32>
    %cst_9 = arith.constant dense<0xFF800000> : vector<1x1xf32>
    %16 = vector.multi_reduction <maximumf>, %15, %cst_9 [1] : vector<1x8x1xf32> to vector<1x1xf32>
    %17 = vector.shape_cast %16 : vector<1x1xf32> to vector<1x1x1xf32>
    %18 = vector.broadcast %17 : vector<1x1x1xf32> to vector<1x8x1xf32>
    %19 = arith.subf %15, %18 : vector<1x8x1xf32>
    %20 = math.exp %19 : vector<1x8x1xf32>
    %cst_10 = arith.constant dense<0.000000e+00> : vector<1x1xf32>
    %21 = vector.multi_reduction <add>, %20, %cst_10 [1] : vector<1x8x1xf32> to vector<1x1xf32>
    %22 = vector.shape_cast %21 : vector<1x1xf32> to vector<1x1x1xf32>
    %23 = vector.broadcast %20 : vector<1x8x1xf32> to vector<1x8x32xf32>
    %24 = arith.mulf %23, %0 : vector<1x8x32xf32>
    %cst_11 = arith.constant dense<0.000000e+00> : vector<1x32xf32>
    %25 = vector.multi_reduction <add>, %24, %cst_11 [1] : vector<1x8x32xf32> to vector<1x32xf32>
    %26 = vector.shape_cast %25 : vector<1x32xf32> to vector<1x1x32xf32>
    %27 = tpu.reciprocal %22 {approx = true} : vector<1x1x1xf32> -> vector<1x1x1xf32>
    %28 = vector.broadcast %27 : vector<1x1x1xf32> to vector<1x1x32xf32>
    %29 = arith.mulf %26, %28 : vector<1x1x32xf32>
    %c0_12 = arith.constant 0 : index
    %c0_13 = arith.constant 0 : index
    %c0_14 = arith.constant 0 : index
    %30 = vector.load %arg5[%c0_12, %c0_13, %c0_14] : memref<1x1x32xf32, #tpu.memory_space<vmem>>, vector<1x1x32xf32>
    tpu.vector_store %arg5[%c0_12, %c0_13, %c0_14], %29 {strides = array<i32>} : memref<1x1x32xf32, #tpu.memory_space<vmem>>, vector<1x1x32xf32>,
    return
  }
  func.func @transform_0(%arg0: i32) -> (i32, i32, i32) {
    %c0_i32 = arith.constant 0 : i32
    %c0_i32_0 = arith.constant 0 : i32
    %c0_i32_1 = arith.constant 0 : i32
    return %arg0, %c0_i32, %c0_i32_0 : i32, i32, i32
  }
  func.func @transform_1(%arg0: i32) -> (i32, i32) {
    %c0_i32 = arith.constant 0 : i32
    %c0_i32_0 = arith.constant 0 : i32
    %c0_i32_1 = arith.constant 0 : i32
    return %c0_i32, %c0_i32_0 : i32, i32
  }
  func.func @transform_2(%arg0: i32) -> (i32, i32) {
    %c0_i32 = arith.constant 0 : i32
    %c0_i32_0 = arith.constant 0 : i32
    %c0_i32_1 = arith.constant 0 : i32
    return %c0_i32, %c0_i32_0 : i32, i32
  }
  func.func @transform_3(%arg0: i32) -> (i32, i32) {
    %c0_i32 = arith.constant 0 : i32
    %c0_i32_0 = arith.constant 0 : i32
    %c0_i32_1 = arith.constant 0 : i32
    return %c0_i32, %c0_i32_0 : i32, i32
  }
  func.func @transform_4(%arg0: i32) -> (i32, i32, i32) {
    %c0_i32 = arith.constant 0 : i32
    %c0_i32_0 = arith.constant 0 : i32
    %c0_i32_1 = arith.constant 0 : i32
    return %arg0, %c0_i32, %c0_i32_0 : i32, i32, i32
  }
}

</mosaic_0001>

<llo_original>
// kernel: tpu_custom_call.1
$region0: #{tpu_custom_call.1}
  #allocation0 [shape = 'u32[]', space=smem, size = 0x4, offset = 0x4, fixed_abs, tag = 'smem constant byte address 0x4 - core index']
  #allocation1 [shape = 'u32[144,128]{1,0:T(1,128)}', space=vmem, size = 0x12000, scoped, tag = 'internal scratch']
  %s0 = inlined_call_operand.hbm [shape: f32[2,8,32], index: 0, kind: input, shape index: {}]
  %s1 = inlined_call_operand.hbm [shape: bf16[32,32], index: 1, kind: input, shape index: {}]
  %s2 = inlined_call_operand.vmem [shape: f32[1,32], index: 2, kind: input, shape index: {}]
  %s3 = inlined_call_operand.vmem [shape: f32[1,32], index: 3, kind: input, shape index: {}]
  %s4 = inlined_call_operand.hbm [shape: f32[2,1,32], index: 4, kind: output, shape index: {}]
  %s5 = sld [smem:[#allocation0]]
  $region57: #{tpu_custom_call.1} parent=0
    _
  %s7 = ssub.s32 1, %s5
  %s8 = scalar_select 0, %s7, %s5
  $region1: #{tpu_custom_call.1} parent=0
    #allocation2 [shape = 'u8[8192]{0}', space=vmem, size = 0x2000, scoped, tag = 'input window, operand 0']
    #allocation3 [shape = 's32[2]{0}', space=sflag, size = 0x8, scoped, tag = 'scoped memory for tpu_custom_call.1']
    #allocation4 [shape = 's32[2]{0}', space=sflag, size = 0x8, scoped, tag = 'scoped memory for tpu_custom_call.1']
    #allocation5 [shape = 'u8[8192]{0}', space=vmem, size = 0x2000, scoped, tag = 'input window, operand 1, single buffered']
    #allocation6 [shape = 's32[1]{0}', space=sflag, size = 0x4, scoped, tag = 'scoped memory for tpu_custom_call.1']
    #allocation7 [shape = 'u8[1024]{0}', space=vmem, size = 0x400, scoped, tag = 'output window, operand 0']
    %9 = vsyncpa [#allocation3], 0
    %s10 = scalar_lea.sflag [#allocation3], 1
    %11 = vsyncpa %s10, 0
    %12 = vsyncpa [#allocation6], 0
    %13 = vsyncpa [#allocation4], 0
    %s14 = scalar_lea.sflag [#allocation4], 1
    %15 = vsyncpa %s14, 0
    loop: start=0, step=1, limit=4
    $region2: #{tpu_custom_call.1} parent=1 // loop_pre_header
      _
    $region3: #{tpu_custom_call.1} parent=1 // loop_header
      %s17 = sphi 0, %s21
      %p18 = scmp.ge.s32.totalorder %s17, 4
      %s27 = sphi 0, %s29
      %s30 = sphi 0, %s27
      %s31 = sphi 0, %s30
      %s47 = sphi 0, %s31
      %s51 = sphi 0, %s51
      %s53 = sphi 0, %s51
      %s54 = sphi 0, %s53
      %s68 = sphi 0, %s54
      %s72 = sphi 0, %s72
      %s74 = sphi 0, %s72
      %s75 = sphi 0, %s74
      %s89 = sphi 0, %s75
      %s93 = sphi 0, %s93
      %s95 = sphi 0, %s93
      %s96 = sphi 0, %s95
      %s110 = sphi 0, %s96
      %s116 = sphi 0, %s118
      %s119 = sphi 0, %s116
      %s120 = sphi 0, %s119
      %s136 = sphi 0, %s120
    $region4: #{tpu_custom_call.1} parent=1 // loop_header_branch
      %20 = sbr.rel (%p18) target = $region8
    $region5: #{tpu_custom_call.1} parent=1 // loop_body
      %s22 = ssub.s32 %s17, 1
      %s23 = ssub.s32 %s17, 2
      %s24 = sadd.s32 %s17, 1
      %s25 = ssub.s32 %s17, %s24
      %p26 = scmp.eq.s32.totalorder %s25, 0
      %s28 = sadd.s32 %s27, 1
      %s29 = scalar_select %p26, %s27, %s28
      %p32 = pneg %p26
      %p33 = scmp.eq.s32.totalorder %s17, 1
      %p34 = por %p32, %p33
      %p35 = scmp.ne.s32.totalorder %s27, %s30
      %p36 = scmp.eq.s32.totalorder %s17, 0
      %p37 = por %p35, %p36
      %p38 = scmp.ne.s32.totalorder %s27, %s30
      %p39 = scmp.eq.s32.totalorder %s22, 1
      %p40 = por %p38, %p39
      %p41 = scmp.ne.s32.totalorder %s30, %s31
      %p42 = scmp.eq.s32.totalorder %s22, 0
      %p43 = por %p41, %p42
      %p44 = scmp.ne.s32.totalorder %s30, %s31
      %p45 = scmp.eq.s32.totalorder %s23, 1
      %p46 = por %p44, %p45
      %p48 = scmp.ne.s32.totalorder %s31, %s47
      %p49 = scmp.eq.s32.totalorder %s23, 0
      %p50 = por %p48, %p49
      %s52 = sadd.s32 %s51, 1
      %p55 = scmp.eq.s32.totalorder %s17, 1
      %p56 = scmp.ne.s32.totalorder %s51, %s53
      %p57 = scmp.eq.s32.totalorder %s17, 0
      %p58 = por %p56, %p57
      %p59 = scmp.ne.s32.totalorder %s51, %s53
      %p60 = scmp.eq.s32.totalorder %s22, 1
      %p61 = por %p59, %p60
      %p62 = scmp.ne.s32.totalorder %s53, %s54
      %p63 = scmp.eq.s32.totalorder %s22, 0
      %p64 = por %p62, %p63
      %p65 = scmp.ne.s32.totalorder %s53, %s54
      %p66 = scmp.eq.s32.totalorder %s23, 1
      %p67 = por %p65, %p66
      %p69 = scmp.ne.s32.totalorder %s54, %s68
      %p70 = scmp.eq.s32.totalorder %s23, 0
      %p71 = por %p69, %p70
      %s73 = sadd.s32 %s72, 1
      %p76 = scmp.eq.s32.totalorder %s17, 1
      %p77 = scmp.ne.s32.totalorder %s72, %s74
      %p78 = scmp.eq.s32.totalorder %s17, 0
      %p79 = por %p77, %p78
      %p80 = scmp.ne.s32.totalorder %s72, %s74
      %p81 = scmp.eq.s32.totalorder %s22, 1
      %p82 = por %p80, %p81
      %p83 = scmp.ne.s32.totalorder %s74, %s75
      %p84 = scmp.eq.s32.totalorder %s22, 0
      %p85 = por %p83, %p84
      %p86 = scmp.ne.s32.totalorder %s74, %s75
      %p87 = scmp.eq.s32.totalorder %s23, 1
      %p88 = por %p86, %p87
      %p90 = scmp.ne.s32.totalorder %s75, %s89
      %p91 = scmp.eq.s32.totalorder %s23, 0
      %p92 = por %p90, %p91
      %s94 = sadd.s32 %s93, 1
      %p97 = scmp.eq.s32.totalorder %s17, 1
      %p98 = scmp.ne.s32.totalorder %s93, %s95
      %p99 = scmp.eq.s32.totalorder %s17, 0
      %p100 = por %p98, %p99
      %p101 = scmp.ne.s32.totalorder %s93, %s95
      %p102 = scmp.eq.s32.totalorder %s22, 1
      %p103 = por %p101, %p102
      %p104 = scmp.ne.s32.totalorder %s95, %s96
      %p105 = scmp.eq.s32.totalorder %s22, 0
      %p106 = por %p104, %p105
      %p107 = scmp.ne.s32.totalorder %s95, %s96
      %p108 = scmp.eq.s32.totalorder %s23, 1
      %p109 = por %p107, %p108
      %p111 = scmp.ne.s32.totalorder %s96, %s110
      %p112 = scmp.eq.s32.totalorder %s23, 0
      %p113 = por %p111, %p112
      %s114 = ssub.s32 %s17, %s24
      %p115 = scmp.eq.s32.totalorder %s114, 0
      %s117 = sadd.s32 %s116, 1
      %s118 = scalar_select %p115, %s116, %s117
      %p121 = pneg %p115
      %p122 = scmp.eq.s32.totalorder %s17, 1
      %p123 = por %p121, %p122
      %p124 = scmp.ne.s32.totalorder %s116, %s119
      %p125 = scmp.eq.s32.totalorder %s17, 0
      %p126 = por %p124, %p125
      %p127 = scmp.ne.s32.totalorder %s116, %s119
      %p128 = scmp.eq.s32.totalorder %s22, 1
      %p129 = por %p127, %p128
      %p130 = scmp.ne.s32.totalorder %s119, %s120
      %p131 = scmp.eq.s32.totalorder %s22, 0
      %p132 = por %p130, %p131
      %p133 = scmp.ne.s32.totalorder %s119, %s120
      %p134 = scmp.eq.s32.totalorder %s23, 1
      %p135 = por %p133, %p134
      %p137 = scmp.ne.s32.totalorder %s120, %s136
      %p138 = scmp.eq.s32.totalorder %s23, 0
      %p139 = por %p137, %p138
      %p140 = scmp.le.s32.totalorder 1, %s17
      %p141 = scmp.lt.s32.totalorder %s17, 3
      %p142 = pnand %p140, %p141
      %p143 = pneg %p142
      // Predicated region
      $region9: #{tpu_custom_call.1} parent=5 // pred_check
        _
      $region10: #{tpu_custom_call.1} parent=5 // pred_check_branch
        %145 = sbr.rel (%p142) target = $region12
      $region11: #{tpu_custom_call.1} parent=5 // pred_region
        %s146 = ssub.s32 %s17, 1
        // Predicated region
        $region13: #{tpu_custom_call.1} parent=11 // pred_check
          %p147 = pneg %p64
        $region14: #{tpu_custom_call.1} parent=11 // pred_check_branch
          %149 = sbr.rel (%p147) target = $region16
        $region15: #{tpu_custom_call.1} parent=11 // pred_region
          %s151 = ssub.s32 256, 256
          %152 = vsyncadd [#allocation6], %s151
          %s153 = sshll.u32 [#allocation5], 4
          %s154 = int_to_ptr.vmem [resolvable:$true] %s153
          %159 = dma.hbm_to_vmem [thread:$0]  %s1, 256, %s154, [#allocation6], 64, 64, 4
        $region16: #{tpu_custom_call.1} parent=11 // pred_fallthru
          _
        // Predicated region
        $region17: #{tpu_custom_call.1} parent=11 // pred_check
          %p160 = pneg %p85
        $region18: #{tpu_custom_call.1} parent=11 // pred_check_branch
          %162 = sbr.rel (%p160) target = $region20
        $region19: #{tpu_custom_call.1} parent=11 // pred_region
          _
        $region20: #{tpu_custom_call.1} parent=11 // pred_fallthru
          _
        // Predicated region
        $region21: #{tpu_custom_call.1} parent=11 // pred_check
          %p163 = pneg %p106
        $region22: #{tpu_custom_call.1} parent=11 // pred_check_branch
          %165 = sbr.rel (%p163) target = $region24
        $region23: #{tpu_custom_call.1} parent=11 // pred_region
          _
        $region24: #{tpu_custom_call.1} parent=11 // pred_fallthru
          _
      $region12: #{tpu_custom_call.1} parent=5 // pred_fallthru
        _
      %p166 = scmp.lt.s32.totalorder %s17, 2
      // Predicated region
      $region25: #{tpu_custom_call.1} parent=5 // pred_check
        %p167 = pneg %p166
      $region26: #{tpu_custom_call.1} parent=5 // pred_check_branch
        %169 = sbr.rel (%p167) target = $region28
      $region27: #{tpu_custom_call.1} parent=5 // pred_region
        // Predicated region
        $region29: #{tpu_custom_call.1} parent=27 // pred_check
          %p170 = pneg %p37
        $region30: #{tpu_custom_call.1} parent=27 // pred_check_branch
          %172 = sbr.rel (%p170) target = $region32
        $region31: #{tpu_custom_call.1} parent=27 // pred_region
          %s173 = sand.u32 %s27, 1
          %s174 = scalar_lea.sflag [#allocation3], %s173
          %s175 = sand.u32 %s27, 1
          %s176 = smul.addr %s175, 8
          %s177 = scalar_lea.vmem [#allocation2], %s176
          %s179 = ssub.s32 128, 128
          %180 = vsyncadd %s174, %s179
          %s181 = smul.addr %s17, 128
          %s182 = scalar_lea.hbm %s0, %s181
          %s184 = sshll.u32 %s177, 4
          %s185 = int_to_ptr.vmem [resolvable:$true] %s184
          %187 = dma.hbm_to_vmem [thread:$0]  %s182, 128, %s185, %s174
        $region32: #{tpu_custom_call.1} parent=27 // pred_fallthru
          _
      $region28: #{tpu_custom_call.1} parent=5 // pred_fallthru
        _
      %p188 = scmp.le.s32.totalorder 1, %s17
      %p189 = scmp.lt.s32.totalorder %s17, 3
      %p190 = pnand %p188, %p189
      %p191 = pneg %p190
      // Predicated region
      $region33: #{tpu_custom_call.1} parent=5 // pred_check
        _
      $region34: #{tpu_custom_call.1} parent=5 // pred_check_branch
        %193 = sbr.rel (%p190) target = $region36
      $region35: #{tpu_custom_call.1} parent=5 // pred_region
        %s194 = ssub.s32 %s17, 1
        %s195 = sand.u32 %s30, 1
        %s196 = scalar_lea.sflag [#allocation3], %s195
        %s197 = sand.u32 %s30, 1
        %s198 = smul.addr %s197, 8
        %s199 = scalar_lea.vmem [#allocation2], %s198
        // Predicated region
        $region37: #{tpu_custom_call.1} parent=35 // pred_check
          %p200 = pneg %p43
        $region38: #{tpu_custom_call.1} parent=35 // pred_check_branch
          %202 = sbr.rel (%p200) target = $region40
        $region39: #{tpu_custom_call.1} parent=35 // pred_region
          %203 = dma.done %s196, 128
        $region40: #{tpu_custom_call.1} parent=35 // pred_fallthru
          _
        // Predicated region
        $region41: #{tpu_custom_call.1} parent=35 // pred_check
          %p204 = pneg %p64
        $region42: #{tpu_custom_call.1} parent=35 // pred_check_branch
          %206 = sbr.rel (%p204) target = $region44
        $region43: #{tpu_custom_call.1} parent=35 // pred_region
          %207 = dma.done [#allocation6], 256
        $region44: #{tpu_custom_call.1} parent=35 // pred_fallthru
          _
        %s208 = sand.u32 %s30, 1
        %s209 = scalar_lea.sflag [#allocation3], %s208
        %s210 = sand.u32 %s30, 1
        %s211 = smul.addr %s210, 8
        %s212 = scalar_lea.vmem [#allocation2], %s211
        %p213 = pneg %p43
        %p214 = pneg %p40
        %p215 = pneg %p64
        %p216 = pneg %p61
        %p217 = pneg %p85
        %p218 = pneg %p82
        %p219 = pneg %p106
        %p220 = pneg %p103
        %p221 = pneg %p132
        %p222 = pneg %p129
        %s223 = sand.u32 %s119, 1
        %s224 = scalar_lea.sflag [#allocation4], %s223
        %s225 = sand.u32 %s119, 1
        %s226 = scalar_lea.vmem [#allocation7], %s225
        %v228 = vld [vmem:[%s199] sm:$0xff]
        %v229 = vld [vmem:[#allocation5] sm:$0xf]
        %v230 = vld [vmem:[#allocation5 + $0x4] sm:$0xf]
        %v231 = vld [vmem:[#allocation5 + $0x8] sm:$0xf]
        %v232 = vld [vmem:[#allocation5 + $0xc] sm:$0xf]
        %v233 = vld [vmem:[%s2] sm:$0x1]
        %v234 = vld [vmem:[%s3] sm:$0x1]
        %v235 = vpack.c.bf16 %v228, %v228
        %v237 = vlaneseq
        %v238 = vshrl.u32 %v237, 7
        %v239 = vsub.s32 0, %v238
        %v240 = vrot.slane %v233, %v239
        %v246 = vunpack.c.l.b16 %v229
        %v247 = vunpack.c.l.b16 %v230
        %v248 = vunpack.c.l.b16 %v231
        %v249 = vunpack.c.l.b16 %v232
        %v250 = vpack.c.b16 %v247, %v246
        %v251 = vpack.c.b16 %v249, %v248
        %vm254 = vcmask 261120
        %v256 = vsel %vm254, %v235, 0
        %258 = vmatprep.subr.bf16.mxu0 0
        %259 = vmatpush1.bf16.msra.mxu0 %v250
        %260 = vmatprep.subr.bf16.mxu0 0
        %261 = vmatpush1.bf16.msra.mxu0 %v251
        %262 = vmatprep.subr.bf16.mxu0 0
        %263 = vmatpush1.bf16.msra.mxu0 0
        %264 = vmatprep.subr.bf16.mxu0 0
        %265 = vmatpush1.bf16.msra.mxu0 0
        %266 = vmatprep.subr.bf16.mxu0 0
        %267 = vmatpush1.bf16.msra.mxu0 0
        %268 = vmatprep.subr.bf16.mxu0 0
        %269 = vmatpush1.bf16.msra.mxu0 0
        %270 = vmatprep.subr.bf16.mxu0 0
        %271 = vmatpush1.bf16.msra.mxu0 0
        %272 = vmatprep.subr.bf16.mxu0 0
        %273 = vmatpush1.bf16.msra.mxu0 0
        %274 = vmatprep.subr.bf16.mxu0 0
        %275 = vmatpush1.bf16.msra.mxu0 0
        %276 = vmatprep.subr.bf16.mxu0 0
        %277 = vmatpush1.bf16.msra.mxu0 0
        %278 = vmatprep.subr.bf16.mxu0 0
        %279 = vmatpush1.bf16.msra.mxu0 0
        %280 = vmatprep.subr.bf16.mxu0 0
        %281 = vmatpush1.bf16.msra.mxu0 0
        %282 = vmatprep.subr.bf16.mxu0 0
        %283 = vmatpush1.bf16.msra.mxu0 0
        %284 = vmatprep.subr.bf16.mxu0 0
        %285 = vmatpush1.bf16.msra.mxu0 0
        %286 = vmatprep.subr.bf16.mxu0 0
        %287 = vmatpush1.bf16.msra.mxu0 0
        %288 = vmatprep.subr.bf16.mxu0 0
        %289 = vmatpush1.bf16.msra.mxu0 0
        %290 = vmatprep.mubr.bf16.mxu0 0
        %291 = vmatmul.mubr.bf16.gmra.mrb[0].mxu0 %v256
        %v292 = vpop.f32.mrb[0].mxu0
        %v293 = vadd.f32 %v240, %v292
        %v294 = vpop.f32.mrb[0].mxu0
        %v295 = vpop.f32.mrb[0].mxu0
        %v296 = vpop.f32.mrb[0].mxu0
        %297 = vdwg.mxu0
        %v298 = vtanh.pop %v293
        %v300 = vlaneseq
        %v301 = vshrl.u32 %v300, 7
        %v302 = vsub.s32 0, %v301
        %v303 = vrot.slane %v234, %v302
        %v305 = vmul.f32 %v298, %v303
        %v306 = vsel %vm254, %v305, 0.0
        %307 = vadd.xlane.f32.xlu0 %v306
        %v308 = vpop.xlane.xlu0 %307
        %v309 = vrot.slane %v308, 4
        %v310 = vmax.f32 %v308, %v309
        %v311 = vrot.slane %v310, 2
        %v312 = vmax.f32 %v310, %v311
        %v313 = vrot.slane %v312, 1
        %v314 = vmax.f32 %v312, %v313
        %v315 = vsub.f32 %v308, %v314
        %v316 = vmul.f32 %v315, 1.442695
        %v317 = vpow.pop %v316
        %v318 = vrot.slane %v317, 4
        %v319 = vadd.f32 %v317, %v318
        %v320 = vrot.slane %v319, 2
        %v321 = vadd.f32 %v319, %v320
        %v322 = vrot.slane %v321, 1
        %v323 = vadd.f32 %v321, %v322
        %v324 = vmul.f32 %v317, %v228
        %v325 = vsel %vm254, %v324, 0.0
        %v326 = vrot.slane %v325, 4
        %v327 = vadd.f32 %v325, %v326
        %v328 = vrot.slane %v327, 2
        %v329 = vadd.f32 %v327, %v328
        %v330 = vrot.slane %v329, 1
        %v331 = vadd.f32 %v329, %v330
        %v332 = vrcp.pop %v323
        %v333 = vmul.f32 %v331, %v332
        %vm334 = vcmask 253952
        %335 = vst.msk [vmem:[%s226] sm:$0x1] %vm334, %v333
        %s336 = sand.u32 %s119, 1
        %s337 = scalar_lea.sflag [#allocation4], %s336
        %s338 = sand.u32 %s119, 1
        %s339 = scalar_lea.vmem [#allocation7], %s338
        // Predicated region
        $region45: #{tpu_custom_call.1} parent=35 // pred_check
          %p340 = pneg %p129
        $region46: #{tpu_custom_call.1} parent=35 // pred_check_branch
          %342 = sbr.rel (%p340) target = $region48
        $region47: #{tpu_custom_call.1} parent=35 // pred_region
          %s344 = ssub.s32 16, 16
          %345 = vsyncadd %s337, %s344
          %s346 = smul.addr %s22, 16
          %s347 = scalar_lea.hbm %s4, %s346
          %s349 = sshll.u32 %s339, 4
          %s350 = int_to_ptr.vmem [resolvable:$true] %s349
          %352 = dma.vmem_to_hbm [thread:$0]  %s350, 16, %s347, %s337
        $region48: #{tpu_custom_call.1} parent=35 // pred_fallthru
          _
      $region36: #{tpu_custom_call.1} parent=5 // pred_fallthru
        _
      %p353 = scmp.le.s32.totalorder 2, %s17
      // Predicated region
      $region49: #{tpu_custom_call.1} parent=5 // pred_check
        %p354 = pneg %p353
      $region50: #{tpu_custom_call.1} parent=5 // pred_check_branch
        %356 = sbr.rel (%p354) target = $region52
      $region51: #{tpu_custom_call.1} parent=5 // pred_region
        %s357 = ssub.s32 %s17, 2
        // Predicated region
        $region53: #{tpu_custom_call.1} parent=51 // pred_check
          %p358 = pneg %p135
        $region54: #{tpu_custom_call.1} parent=51 // pred_check_branch
          %360 = sbr.rel (%p358) target = $region56
        $region55: #{tpu_custom_call.1} parent=51 // pred_region
          %s361 = sand.u32 %s120, 1
          %s362 = scalar_lea.sflag [#allocation4], %s361
          %s363 = sand.u32 %s120, 1
          %s364 = scalar_lea.vmem [#allocation7], %s363
          %365 = dma.done %s362, 16
        $region56: #{tpu_custom_call.1} parent=51 // pred_fallthru
          _
      $region52: #{tpu_custom_call.1} parent=5 // pred_fallthru
        _
    $region6: #{tpu_custom_call.1} parent=1 // loop_footer
      %s21 = sadd.s32 1, %s17
    $region7: #{tpu_custom_call.1} parent=1 // loop_footer_branch
      %16 = sbr.rel target = $region3
    $region8: #{tpu_custom_call.1} parent=1 // loop_exit
      _
    %366 = vsyncpa [#allocation3], 1
    %s367 = scalar_lea.sflag [#allocation3], 1
    %368 = vsyncpa %s367, 1
    %369 = vsyncpa [#allocation6], 1
    %370 = vsyncpa [#allocation4], 1
    %s371 = scalar_lea.sflag [#allocation4], 1
    %372 = vsyncpa %s371, 1

// kernel: tpu_custom_call.1
$region0: #{tpu_custom_call.1}
  #allocation0 [shape = 'u32[]', space=smem, size = 0x4, offset = 0x4, fixed_abs, tag = 'smem constant byte address 0x4 - core index']
  #allocation1 [shape = 'u32[144,128]{1,0:T(1,128)}', space=vmem, size = 0x12000, scoped, tag = 'internal scratch']
  %s0 = inlined_call_operand.hbm [shape: f32[2,8,32], index: 0, kind: input, shape index: {}]
  %s1 = inlined_call_operand.hbm [shape: bf16[32,32], index: 1, kind: input, shape index: {}]
  %s2 = inlined_call_operand.vmem [shape: f32[1,32], index: 2, kind: input, shape index: {}]
  %s3 = inlined_call_operand.vmem [shape: f32[1,32], index: 3, kind: input, shape index: {}]
  %s4 = inlined_call_operand.hbm [shape: f32[2,1,32], index: 4, kind: output, shape index: {}]
  %s5 = sld [smem:[#allocation0]]
  $region57: #{tpu_custom_call.1} parent=0
    _
  %s7 = ssub.s32 1, %s5
  %s8 = scalar_select 0, %s7, %s5
  $region1: #{tpu_custom_call.1} parent=0
    #allocation2 [shape = 'u8[8192]{0}', space=vmem, size = 0x2000, scoped, tag = 'input window, operand 0']
    #allocation3 [shape = 's32[2]{0}', space=sflag, size = 0x8, scoped, tag = 'scoped memory for tpu_custom_call.1']
    #allocation4 [shape = 's32[2]{0}', space=sflag, size = 0x8, scoped, tag = 'scoped memory for tpu_custom_call.1']
    #allocation5 [shape = 'u8[8192]{0}', space=vmem, size = 0x2000, scoped, tag = 'input window, operand 1, single buffered']
    #allocation6 [shape = 's32[1]{0}', space=sflag, size = 0x4, scoped, tag = 'scoped memory for tpu_custom_call.1']
    #allocation7 [shape = 'u8[1024]{0}', space=vmem, size = 0x400, scoped, tag = 'output window, operand 0']
    %9 = vsyncpa [#allocation3], 0
    %s10 = scalar_lea.sflag [#allocation3], 1
    %11 = vsyncpa %s10, 0
    %12 = vsyncpa [#allocation6], 0
    %13 = vsyncpa [#allocation4], 0
    %s14 = scalar_lea.sflag [#allocation4], 1
    %15 = vsyncpa %s14, 0
    loop: start=0, step=1, limit=4
    $region2: #{tpu_custom_call.1} parent=1 // loop_pre_header
      _
    $region3: #{tpu_custom_call.1} parent=1 // loop_header
      %s17 = sphi 0, %s21
      %p18 = scmp.ge.s32.totalorder %s17, 4
      %s27 = sphi 0, %s29
      %s30 = sphi 0, %s27
      %s31 = sphi 0, %s30
      %s47 = sphi 0, %s31
      %s51 = sphi 0, %s51
      %s53 = sphi 0, %s51
      %s54 = sphi 0, %s53
      %s68 = sphi 0, %s54
      %s72 = sphi 0, %s72
      %s74 = sphi 0, %s72
      %s75 = sphi 0, %s74
      %s89 = sphi 0, %s75
      %s93 = sphi 0, %s93
      %s95 = sphi 0, %s93
      %s96 = sphi 0, %s95
      %s110 = sphi 0, %s96
      %s116 = sphi 0, %s118
      %s119 = sphi 0, %s116
      %s120 = sphi 0, %s119
      %s136 = sphi 0, %s120
    $region4: #{tpu_custom_call.1} parent=1 // loop_header_branch
      %20 = sbr.rel (%p18) target = $region8
    $region5: #{tpu_custom_call.1} parent=1 // loop_body
      %s22 = ssub.s32 %s17, 1
      %s23 = ssub.s32 %s17, 2
      %s24 = sadd.s32 %s17, 1
      %s25 = ssub.s32 %s17, %s24
      %p26 = scmp.eq.s32.totalorder %s25, 0
      %s28 = sadd.s32 %s27, 1
      %s29 = scalar_select %p26, %s27, %s28
      %p32 = pneg %p26
      %p33 = scmp.eq.s32.totalorder %s17, 1
      %p34 = por %p32, %p33
      %p35 = scmp.ne.s32.totalorder %s27, %s30
      %p36 = scmp.eq.s32.totalorder %s17, 0
      %p37 = por %p35, %p36
      %p38 = scmp.ne.s32.totalorder %s27, %s30
      %p39 = scmp.eq.s32.totalorder %s22, 1
      %p40 = por %p38, %p39
      %p41 = scmp.ne.s32.totalorder %s30, %s31
      %p42 = scmp.eq.s32.totalorder %s22, 0
      %p43 = por %p41, %p42
      %p44 = scmp.ne.s32.totalorder %s30, %s31
      %p45 = scmp.eq.s32.totalorder %s23, 1
      %p46 = por %p44, %p45
      %p48 = scmp.ne.s32.totalorder %s31, %s47
      %p49 = scmp.eq.s32.totalorder %s23, 0
      %p50 = por %p48, %p49
      %s52 = sadd.s32 %s51, 1
      %p55 = scmp.eq.s32.totalorder %s17, 1
      %p56 = scmp.ne.s32.totalorder %s51, %s53
      %p57 = scmp.eq.s32.totalorder %s17, 0
      %p58 = por %p56, %p57
      %p59 = scmp.ne.s32.totalorder %s51, %s53
      %p60 = scmp.eq.s32.totalorder %s22, 1
      %p61 = por %p59, %p60
      %p62 = scmp.ne.s32.totalorder %s53, %s54
      %p63 = scmp.eq.s32.totalorder %s22, 0
      %p64 = por %p62, %p63
      %p65 = scmp.ne.s32.totalorder %s53, %s54
      %p66 = scmp.eq.s32.totalorder %s23, 1
      %p67 = por %p65, %p66
      %p69 = scmp.ne.s32.totalorder %s54, %s68
      %p70 = scmp.eq.s32.totalorder %s23, 0
      %p71 = por %p69, %p70
      %s73 = sadd.s32 %s72, 1
      %p76 = scmp.eq.s32.totalorder %s17, 1
      %p77 = scmp.ne.s32.totalorder %s72, %s74
      %p78 = scmp.eq.s32.totalorder %s17, 0
      %p79 = por %p77, %p78
      %p80 = scmp.ne.s32.totalorder %s72, %s74
      %p81 = scmp.eq.s32.totalorder %s22, 1
      %p82 = por %p80, %p81
      %p83 = scmp.ne.s32.totalorder %s74, %s75
      %p84 = scmp.eq.s32.totalorder %s22, 0
      %p85 = por %p83, %p84
      %p86 = scmp.ne.s32.totalorder %s74, %s75
      %p87 = scmp.eq.s32.totalorder %s23, 1
      %p88 = por %p86, %p87
      %p90 = scmp.ne.s32.totalorder %s75, %s89
      %p91 = scmp.eq.s32.totalorder %s23, 0
      %p92 = por %p90, %p91
      %s94 = sadd.s32 %s93, 1
      %p97 = scmp.eq.s32.totalorder %s17, 1
      %p98 = scmp.ne.s32.totalorder %s93, %s95
      %p99 = scmp.eq.s32.totalorder %s17, 0
      %p100 = por %p98, %p99
      %p101 = scmp.ne.s32.totalorder %s93, %s95
      %p102 = scmp.eq.s32.totalorder %s22, 1
      %p103 = por %p101, %p102
      %p104 = scmp.ne.s32.totalorder %s95, %s96
      %p105 = scmp.eq.s32.totalorder %s22, 0
      %p106 = por %p104, %p105
      %p107 = scmp.ne.s32.totalorder %s95, %s96
      %p108 = scmp.eq.s32.totalorder %s23, 1
      %p109 = por %p107, %p108
      %p111 = scmp.ne.s32.totalorder %s96, %s110
      %p112 = scmp.eq.s32.totalorder %s23, 0
      %p113 = por %p111, %p112
      %s114 = ssub.s32 %s17, %s24
      %p115 = scmp.eq.s32.totalorder %s114, 0
      %s117 = sadd.s32 %s116, 1
      %s118 = scalar_select %p115, %s116, %s117
      %p121 = pneg %p115
      %p122 = scmp.eq.s32.totalorder %s17, 1
      %p123 = por %p121, %p122
      %p124 = scmp.ne.s32.totalorder %s116, %s119
      %p125 = scmp.eq.s32.totalorder %s17, 0
      %p126 = por %p124, %p125
      %p127 = scmp.ne.s32.totalorder %s116, %s119
      %p128 = scmp.eq.s32.totalorder %s22, 1
      %p129 = por %p127, %p128
      %p130 = scmp.ne.s32.totalorder %s119, %s120
      %p131 = scmp.eq.s32.totalorder %s22, 0
      %p132 = por %p130, %p131
      %p133 = scmp.ne.s32.totalorder %s119, %s120
      %p134 = scmp.eq.s32.totalorder %s23, 1
      %p135 = por %p133, %p134
      %p137 = scmp.ne.s32.totalorder %s120, %s136
      %p138 = scmp.eq.s32.totalorder %s23, 0
      %p139 = por %p137, %p138
      %p140 = scmp.le.s32.totalorder 1, %s17
      %p141 = scmp.lt.s32.totalorder %s17, 3
      %p142 = pnand %p140, %p141
      %p143 = pneg %p142
      // Predicated region
      $region9: #{tpu_custom_call.1} parent=5 // pred_check
        _
      $region10: #{tpu_custom_call.1} parent=5 // pred_check_branch
        %145 = sbr.rel (%p142) target = $region12
      $region11: #{tpu_custom_call.1} parent=5 // pred_region
        %s146 = ssub.s32 %s17, 1
        // Predicated region
        $region13: #{tpu_custom_call.1} parent=11 // pred_check
          %p147 = pneg %p64
        $region14: #{tpu_custom_call.1} parent=11 // pred_check_branch
          %149 = sbr.rel (%p147) target = $region16
        $region15: #{tpu_custom_call.1} parent=11 // pred_region
          %s151 = ssub.s32 256, 256
          %152 = vsyncadd [#allocation6], %s151
          %s153 = sshll.u32 [#allocation5], 4
          %s154 = int_to_ptr.vmem [resolvable:$true] %s153
          %159 = dma.hbm_to_vmem [thread:$0]  %s1, 256, %s154, [#allocation6], 64, 64, 4
        $region16: #{tpu_custom_call.1} parent=11 // pred_fallthru
          _
        // Predicated region
        $region17: #{tpu_custom_call.1} parent=11 // pred_check
          %p160 = pneg %p85
        $region18: #{tpu_custom_call.1} parent=11 // pred_check_branch
          %162 = sbr.rel (%p160) target = $region20
        $region19: #{tpu_custom_call.1} parent=11 // pred_region
          _
        $region20: #{tpu_custom_call.1} parent=11 // pred_fallthru
          _
        // Predicated region
        $region21: #{tpu_custom_call.1} parent=11 // pred_check
          %p163 = pneg %p106
        $region22: #{tpu_custom_call.1} parent=11 // pred_check_branch
          %165 = sbr.rel (%p163) target = $region24
        $region23: #{tpu_custom_call.1} parent=11 // pred_region
          _
        $region24: #{tpu_custom_call.1} parent=11 // pred_fallthru
          _
      $region12: #{tpu_custom_call.1} parent=5 // pred_fallthru
        _
      %p166 = scmp.lt.s32.totalorder %s17, 2
      // Predicated region
      $region25: #{tpu_custom_call.1} parent=5 // pred_check
        %p167 = pneg %p166
      $region26: #{tpu_custom_call.1} parent=5 // pred_check_branch
        %169 = sbr.rel (%p167) target = $region28
      $region27: #{tpu_custom_call.1} parent=5 // pred_region
        // Predicated region
        $region29: #{tpu_custom_call.1} parent=27 // pred_check
          %p170 = pneg %p37
        $region30: #{tpu_custom_call.1} parent=27 // pred_check_branch
          %172 = sbr.rel (%p170) target = $region32
        $region31: #{tpu_custom_call.1} parent=27 // pred_region
          %s173 = sand.u32 %s27, 1
          %s174 = scalar_lea.sflag [#allocation3], %s173
          %s175 = sand.u32 %s27, 1
          %s176 = smul.addr %s175, 8
          %s177 = scalar_lea.vmem [#allocation2], %s176
          %s179 = ssub.s32 128, 128
          %180 = vsyncadd %s174, %s179
          %s181 = smul.addr %s17, 128
          %s182 = scalar_lea.hbm %s0, %s181
          %s184 = sshll.u32 %s177, 4
          %s185 = int_to_ptr.vmem [resolvable:$true] %s184
          %187 = dma.hbm_to_vmem [thread:$0]  %s182, 128, %s185, %s174
        $region32: #{tpu_custom_call.1} parent=27 // pred_fallthru
          _
      $region28: #{tpu_custom_call.1} parent=5 // pred_fallthru
        _
      %p188 = scmp.le.s32.totalorder 1, %s17
      %p189 = scmp.lt.s32.totalorder %s17, 3
      %p190 = pnand %p188, %p189
      %p191 = pneg %p190
      // Predicated region
      $region33: #{tpu_custom_call.1} parent=5 // pred_check
        _
      $region34: #{tpu_custom_call.1} parent=5 // pred_check_branch
        %193 = sbr.rel (%p190) target = $region36
      $region35: #{tpu_custom_call.1} parent=5 // pred_region
        %s194 = ssub.s32 %s17, 1
        %s195 = sand.u32 %s30, 1
        %s196 = scalar_lea.sflag [#allocation3], %s195
        %s197 = sand.u32 %s30, 1
        %s198 = smul.addr %s197, 8
        %s199 = scalar_lea.vmem [#allocation2], %s198
        // Predicated region
        $region37: #{tpu_custom_call.1} parent=35 // pred_check
          %p200 = pneg %p43
        $region38: #{tpu_custom_call.1} parent=35 // pred_check_branch
          %202 = sbr.rel (%p200) target = $region40
        $region39: #{tpu_custom_call.1} parent=35 // pred_region
          %203 = dma.done %s196, 128
        $region40: #{tpu_custom_call.1} parent=35 // pred_fallthru
          _
        // Predicated region
        $region41: #{tpu_custom_call.1} parent=35 // pred_check
          %p204 = pneg %p64
        $region42: #{tpu_custom_call.1} parent=35 // pred_check_branch
          %206 = sbr.rel (%p204) target = $region44
        $region43: #{tpu_custom_call.1} parent=35 // pred_region
          %207 = dma.done [#allocation6], 256
        $region44: #{tpu_custom_call.1} parent=35 // pred_fallthru
          _
        %s208 = sand.u32 %s30, 1
        %s209 = scalar_lea.sflag [#allocation3], %s208
        %s210 = sand.u32 %s30, 1
        %s211 = smul.addr %s210, 8
        %s212 = scalar_lea.vmem [#allocation2], %s211
        %p213 = pneg %p43
        %p214 = pneg %p40
        %p215 = pneg %p64
        %p216 = pneg %p61
        %p217 = pneg %p85
        %p218 = pneg %p82
        %p219 = pneg %p106
        %p220 = pneg %p103
        %p221 = pneg %p132
        %p222 = pneg %p129
        %s223 = sand.u32 %s119, 1
        %s224 = scalar_lea.sflag [#allocation4], %s223
        %s225 = sand.u32 %s119, 1
        %s226 = scalar_lea.vmem [#allocation7], %s225
        %v228 = vld [vmem:[%s199] sm:$0xff]
        %v229 = vld [vmem:[#allocation5] sm:$0xf]
        %v230 = vld [vmem:[#allocation5 + $0x4] sm:$0xf]
        %v231 = vld [vmem:[#allocation5 + $0x8] sm:$0xf]
        %v232 = vld [vmem:[#allocation5 + $0xc] sm:$0xf]
        %v233 = vld [vmem:[%s2] sm:$0x1]
        %v234 = vld [vmem:[%s3] sm:$0x1]
        %v235 = vpack.c.bf16 %v228, %v228
        %v237 = vlaneseq
        %v238 = vshrl.u32 %v237, 7
        %v239 = vsub.s32 0, %v238
        %v240 = vrot.slane %v233, %v239
        %v246 = vunpack.c.l.b16 %v229
        %v247 = vunpack.c.l.b16 %v230
        %v248 = vunpack.c.l.b16 %v231
        %v249 = vunpack.c.l.b16 %v232
        %v250 = vpack.c.b16 %v247, %v246
        %v251 = vpack.c.b16 %v249, %v248
        %vm254 = vcmask 261120
        %v256 = vsel %vm254, %v235, 0
        %258 = vmatprep.subr.bf16.mxu0 0
        %259 = vmatpush1.bf16.msra.mxu0 %v250
        %260 = vmatprep.subr.bf16.mxu0 0
        %261 = vmatpush1.bf16.msra.mxu0 %v251
        %262 = vmatprep.subr.bf16.mxu0 0
        %263 = vmatpush1.bf16.msra.mxu0 0
        %264 = vmatprep.subr.bf16.mxu0 0
        %265 = vmatpush1.bf16.msra.mxu0 0
        %266 = vmatprep.subr.bf16.mxu0 0
        %267 = vmatpush1.bf16.msra.mxu0 0
        %268 = vmatprep.subr.bf16.mxu0 0
        %269 = vmatpush1.bf16.msra.mxu0 0
        %270 = vmatprep.subr.bf16.mxu0 0
        %271 = vmatpush1.bf16.msra.mxu0 0
        %272 = vmatprep.subr.bf16.mxu0 0
        %273 = vmatpush1.bf16.msra.mxu0 0
        %274 = vmatprep.subr.bf16.mxu0 0
        %275 = vmatpush1.bf16.msra.mxu0 0
        %276 = vmatprep.subr.bf16.mxu0 0
        %277 = vmatpush1.bf16.msra.mxu0 0
        %278 = vmatprep.subr.bf16.mxu0 0
        %279 = vmatpush1.bf16.msra.mxu0 0
        %280 = vmatprep.subr.bf16.mxu0 0
        %281 = vmatpush1.bf16.msra.mxu0 0
        %282 = vmatprep.subr.bf16.mxu0 0
        %283 = vmatpush1.bf16.msra.mxu0 0
        %284 = vmatprep.subr.bf16.mxu0 0
        %285 = vmatpush1.bf16.msra.mxu0 0
        %286 = vmatprep.subr.bf16.mxu0 0
        %287 = vmatpush1.bf16.msra.mxu0 0
        %288 = vmatprep.subr.bf16.mxu0 0
        %289 = vmatpush1.bf16.msra.mxu0 0
        %290 = vmatprep.mubr.bf16.mxu0 0
        %291 = vmatmul.mubr.bf16.gmra.mrb[0].mxu0 %v256
        %v292 = vpop.f32.mrb[0].mxu0
        %v293 = vadd.f32 %v240, %v292
        %v294 = vpop.f32.mrb[0].mxu0
        %v295 = vpop.f32.mrb[0].mxu0
        %v296 = vpop.f32.mrb[0].mxu0
        %297 = vdwg.mxu0
        %v298 = vtanh.pop %v293
        %v300 = vlaneseq
        %v301 = vshrl.u32 %v300, 7
        %v302 = vsub.s32 0, %v301
        %v303 = vrot.slane %v234, %v302
        %v305 = vmul.f32 %v298, %v303
        %v306 = vsel %vm254, %v305, 0.0
        %307 = vadd.xlane.f32.xlu0 %v306
        %v308 = vpop.xlane.xlu0 %307
        %v309 = vrot.slane %v308, 4
        %v310 = vmax.f32 %v308, %v309
        %v311 = vrot.slane %v310, 2
        %v312 = vmax.f32 %v310, %v311
        %v313 = vrot.slane %v312, 1
        %v314 = vmax.f32 %v312, %v313
        %v315 = vsub.f32 %v308, %v314
        %v316 = vmul.f32 %v315, 1.442695
        %v317 = vpow.pop %v316
        %v318 = vrot.slane %v317, 4
        %v319 = vadd.f32 %v317, %v318
        %v320 = vrot.slane %v319, 2
        %v321 = vadd.f32 %v319, %v320
        %v322 = vrot.slane %v321, 1
        %v323 = vadd.f32 %v321, %v322
        %v324 = vmul.f32 %v317, %v228
        %v325 = vsel %vm254, %v324, 0.0
        %v326 = vrot.slane %v325, 4
        %v327 = vadd.f32 %v325, %v326
        %v328 = vrot.slane %v327, 2
        %v329 = vadd.f32 %v327, %v328
        %v330 = vrot.slane %v329, 1
        %v331 = vadd.f32 %v329, %v330
        %v332 = vrcp.pop %v323
        %v333 = vmul.f32 %v331, %v332
        %vm334 = vcmask 253952
        %335 = vst.msk [vmem:[%s226] sm:$0x1] %vm334, %v333
        %s336 = sand.u32 %s119, 1
        %s337 = scalar_lea.sflag [#allocation4], %s336
        %s338 = sand.u32 %s119, 1
        %s339 = scalar_lea.vmem [#allocation7], %s338
        // Predicated region
        $region45: #{tpu_custom_call.1} parent=35 // pred_check
          %p340 = pneg %p129
        $region46: #{tpu_custom_call.1} parent=35 // pred_check_branch
          %342 = sbr.rel (%p340) target = $region48
        $region47: #{tpu_custom_call.1} parent=35 // pred_region
          %s344 = ssub.s32 16, 16
          %345 = vsyncadd %s337, %s344
          %s346 = smul.addr %s22, 16
          %s347 = scalar_lea.hbm %s4, %s346
          %s349 = sshll.u32 %s339, 4
          %s350 = int_to_ptr.vmem [resolvable:$true] %s349
          %352 = dma.vmem_to_hbm [thread:$0]  %s350, 16, %s347, %s337
        $region48: #{tpu_custom_call.1} parent=35 // pred_fallthru
          _
      $region36: #{tpu_custom_call.1} parent=5 // pred_fallthru
        _
      %p353 = scmp.le.s32.totalorder 2, %s17
      // Predicated region
      $region49: #{tpu_custom_call.1} parent=5 // pred_check
        %p354 = pneg %p353
      $region50: #{tpu_custom_call.1} parent=5 // pred_check_branch
        %356 = sbr.rel (%p354) target = $region52
      $region51: #{tpu_custom_call.1} parent=5 // pred_region
        %s357 = ssub.s32 %s17, 2
        // Predicated region
        $region53: #{tpu_custom_call.1} parent=51 // pred_check
          %p358 = pneg %p135
        $region54: #{tpu_custom_call.1} parent=51 // pred_check_branch
          %360 = sbr.rel (%p358) target = $region56
        $region55: #{tpu_custom_call.1} parent=51 // pred_region
          %s361 = sand.u32 %s120, 1
          %s362 = scalar_lea.sflag [#allocation4], %s361
          %s363 = sand.u32 %s120, 1
          %s364 = scalar_lea.vmem [#allocation7], %s363
          %365 = dma.done %s362, 16
        $region56: #{tpu_custom_call.1} parent=51 // pred_fallthru
          _
      $region52: #{tpu_custom_call.1} parent=5 // pred_fallthru
        _
    $region6: #{tpu_custom_call.1} parent=1 // loop_footer
      %s21 = sadd.s32 1, %s17
    $region7: #{tpu_custom_call.1} parent=1 // loop_footer_branch
      %16 = sbr.rel target = $region3
    $region8: #{tpu_custom_call.1} parent=1 // loop_exit
      _
    %366 = vsyncpa [#allocation3], 1
    %s367 = scalar_lea.sflag [#allocation3], 1
    %368 = vsyncpa %s367, 1
    %369 = vsyncpa [#allocation6], 1
    %370 = vsyncpa [#allocation4], 1
    %s371 = scalar_lea.sflag [#allocation4], 1
    %372 = vsyncpa %s371, 1

</llo_original>
